<compile_context>
chip_gen: v7x
topology: tpu7x:2x2x1
jax: 0.10.0
libtpu: 0.0.40
codegen_flags: <defaults>
</compile_context>

<pallas_src>
import functools

import jax
import jax.numpy as jnp
from jax.experimental import pallas as pl
from jax.experimental.pallas import tpu as pltpu


_LANES = 128


def _cdiv(a, b):
    return -(-a // b)


def _round_up(a, b):
    return _cdiv(a, b) * b


def _wce_kernel(x_ref, t_ref, out_ref, *, gamma):
    # x_ref:  (2, TR, 128) logits block: [class-0 plane, class-1 plane].
    # t_ref:  (TR, 128) bf16 targets: 0 / 1, padded pixels marked with 2.
    # out_ref:(8, 128) f32 partial sums for this block:
    #         row 0 = sum(f), row 1 = sum(f*t), row 2 = sum(t), rows 3..7 = 0,
    #         where f = -(1-pt)^gamma * logpt per pixel.
    x0 = x_ref[0].astype(jnp.float32)
    x1 = x_ref[1].astype(jnp.float32)
    tf = t_ref[...].astype(jnp.float32)

    valid = (tf < 1.5).astype(jnp.float32)      # 0 on padded pixels
    t01 = tf * valid                            # exact 0/1, 0 on padding

    # Target-class log-prob of a 2-way softmax: logpt = -softplus(z).
    z = (1.0 - 2.0 * t01) * (x1 - x0)           # x_other - x_target
    sp = jnp.maximum(z, 0.0) + jnp.log1p(jnp.exp(-jnp.abs(z)))   # = -logpt >= 0
    if gamma == 0:
        f = sp                                   # (1 - pt)**0 == 1
    else:
        pt = jnp.exp(-sp)
        f = ((1.0 - pt) ** gamma) * sp
    f = f * valid

    sf = jnp.sum(f, axis=0, keepdims=True)           # (1, 128)
    sft = jnp.sum(f * t01, axis=0, keepdims=True)    # (1, 128)
    st = jnp.sum(t01, axis=0, keepdims=True)         # (1, 128)

    rows = jax.lax.broadcasted_iota(jnp.int32, (8, _LANES), 0)
    part = jnp.where(rows == 0, sf,
                     jnp.where(rows == 1, sft,
                               jnp.where(rows == 2, st, 0.0)))
    out_ref[...] = part


def wce_loss(logits_nchw, target_nhw, *, gamma=0, size_average=True, tile_rows=2048):
    """Pallas implementation of WCELoss.forward.

    logits_nchw: (N, 2, H, W) float logits (binary problem).
    target_nhw:  (N, H, W) integer targets in {0, 1}.
    """
    N, C, H, W = logits_nchw.shape
    if C != 2:
        raise ValueError("WCELoss Pallas kernel assumes a binary (C == 2) problem")
    HW = H * W
    M = N * HW  # true pixel count (padding never contributes)

    # Pick a lane-dense layout: each batch's class plane becomes (r, 128).
    gran = _LANES * 16                        # sublane granularity (bf16 packing)
    hw_pad = _round_up(HW, gran)
    r0 = hw_pad // _LANES
    grid_j = max(1, _cdiv(r0, tile_rows))
    t_rows = _round_up(_cdiv(r0, grid_j), 16)
    r = grid_j * t_rows
    hw_pad = r * _LANES

    xp = logits_nchw.reshape(N, 2, HW)        # free reshape, no transpose
    tp = target_nhw.reshape(N, HW)
    if hw_pad != HW:
        pad = hw_pad - HW
        xp = jnp.pad(xp, ((0, 0), (0, 0), (0, pad)))                 # value irrelevant
        tp = jnp.pad(tp, ((0, 0), (0, pad)), constant_values=2)      # sentinel -> masked
    xr = xp.reshape(N, 2, r, _LANES)
    tgt = tp.astype(jnp.bfloat16).reshape(N, r, _LANES)

    kernel = functools.partial(_wce_kernel, gamma=gamma)

    parts = pl.pallas_call(
        kernel,
        out_shape=jax.ShapeDtypeStruct((N, grid_j, 8, _LANES), jnp.float32),
        grid_spec=pltpu.PrefetchScalarGridSpec(
            num_scalar_prefetch=0,
            grid=(N, grid_j),
            in_specs=[
                pl.BlockSpec((None, 2, t_rows, _LANES), lambda n, j: (n, 0, j, 0)),
                pl.BlockSpec((None, t_rows, _LANES), lambda n, j: (n, j, 0)),
            ],
            out_specs=pl.BlockSpec((None, None, 8, _LANES), lambda n, j: (n, j, 0, 0)),
        ),
        compiler_params=pltpu.CompilerParams(
            dimension_semantics=("parallel", "parallel"),
            vmem_limit_bytes=32 * 1024 * 1024,
        ),
    )(xr, tgt)

    # Reduce per-block partials (tiny) and do the class-weight scalar math.
    sum_f = jnp.sum(parts[:, :, 0, :])        # sum of f over all pixels
    s1 = jnp.sum(parts[:, :, 1, :])           # sum of f where target == 1
    sum_c = jnp.sum(parts[:, :, 2, :])        # number of target == 1 pixels
    s0 = sum_f - s1                           # sum of f where target == 0

    total = jnp.float32(M)
    sum_u = total - sum_c
    weight_u = total / (2.0 * sum_u)
    weight_c = total / (2.0 * sum_c)

    # If a class is absent, its weighted contribution is an empty sum (0) in the
    # PyTorch forward (the infinite weight is never gathered); guard the 0 * inf.
    loss0 = jnp.where(sum_u > 0, weight_u * s0, 0.0)
    loss1 = jnp.where(sum_c > 0, weight_c * s1, 0.0)
    loss = loss0 + loss1
    if size_average:
        loss = loss / total
    return loss


def _wce_loss_reference(logits_nchw, target_nhw, gamma=0, size_average=True):
    """Pure-JAX reference mirroring the PyTorch forward, for verification."""
    N, C, H, W = logits_nchw.shape
    x = jnp.transpose(logits_nchw, (0, 2, 3, 1)).reshape(-1, C).astype(jnp.float32)
    t = target_nhw.reshape(-1).astype(jnp.int32)
    total = jnp.float32(t.shape[0])
    sum_c = jnp.sum(t).astype(jnp.float32)
    sum_u = total - sum_c
    alpha = jnp.array([total / (2.0 * sum_u), total / (2.0 * sum_c)], jnp.float32)
    logp = jax.nn.log_softmax(x, axis=1)
    logpt = jnp.take_along_axis(logp, t[:, None], axis=1)[:, 0]
    pt = jnp.exp(logpt)
    at = alpha[t]
    logpt = logpt * at
    loss = -1.0 * (1.0 - pt) ** gamma * logpt
    return jnp.mean(loss) if size_average else jnp.sum(loss)


if __name__ == "__main__":
    key = jax.random.PRNGKey(0)
    k1, k2, k3, k4 = jax.random.split(key, 4)

    # Small binary-segmentation-style shapes.
    N, C, H, W = 2, 2, 16, 16
    logits = jax.random.normal(k1, (N, C, H, W), dtype=jnp.float32)
    target = jax.random.randint(k2, (N, H, W), 0, 2, dtype=jnp.int32)

    for g in (0, 2):
        out = jax.block_until_ready(wce_loss(logits, target, gamma=g))
        ref = _wce_loss_reference(logits, target, gamma=g)
        assert jnp.allclose(out, ref, rtol=1e-4, atol=1e-5), (g, out, ref)

    # Shape that is not tile-divisible: exercises the pad + mask path.
    logits2 = jax.random.normal(k3, (1, 2, 12, 20), dtype=jnp.float32)
    target2 = jax.random.randint(k4, (1, 12, 20), 0, 2, dtype=jnp.int32)
    out2 = jax.block_until_ready(wce_loss(logits2, target2, gamma=0))
    ref2 = _wce_loss_reference(logits2, target2, gamma=0)
    assert jnp.allclose(out2, ref2, rtol=1e-4, atol=1e-5), (out2, ref2)

    print("KERNEL_OK")
</pallas_src>

<mosaic_0001>
module attributes {stable_mosaic.version = 11 : i64} {
  func.func @_wce_kernel(%arg0: i32, %arg1: i32, %arg2: memref<1x2x16x128xf32, #tpu.memory_space<vmem>>, %arg3: memref<1x16x128xbf16, #tpu.memory_space<vmem>>, %arg4: memref<1x1x8x128xf32, #tpu.memory_space<vmem>>) attributes {dimension_semantics = [#tpu.dimension_semantics<parallel>, #tpu.dimension_semantics<parallel>], iteration_bounds = array<i64: 2, 1>, scalar_prefetch = 0 : i64, scratch_operands = 0 : i64, tpu.core_type = #tpu.core_type<tc>, window_params = [{transform_indices = @transform_0, window_bounds = array<i64: 1, 2, 16, 128>}, {transform_indices = @transform_1, window_bounds = array<i64: 1, 16, 128>}, {transform_indices = @transform_2, window_bounds = array<i64: 1, 1, 8, 128>}]} {
    %c0 = arith.constant 0 : index
    %c0_0 = arith.constant 0 : index
    %c0_1 = arith.constant 0 : index
    %c0_2 = arith.constant 0 : index
    %0 = vector.load %arg2[%c0, %c0_0, %c0_1, %c0_2] : memref<1x2x16x128xf32, #tpu.memory_space<vmem>>, vector<1x1x16x128xf32>
    %1 = vector.shape_cast %0 : vector<1x1x16x128xf32> to vector<16x128xf32>
    %c0_3 = arith.constant 0 : index
    %c1 = arith.constant 1 : index
    %c0_4 = arith.constant 0 : index
    %c0_5 = arith.constant 0 : index
    %2 = vector.load %arg2[%c0_3, %c1, %c0_4, %c0_5] : memref<1x2x16x128xf32, #tpu.memory_space<vmem>>, vector<1x1x16x128xf32>
    %3 = vector.shape_cast %2 : vector<1x1x16x128xf32> to vector<16x128xf32>
    %c0_6 = arith.constant 0 : index
    %c0_7 = arith.constant 0 : index
    %c0_8 = arith.constant 0 : index
    %4 = vector.load %arg3[%c0_6, %c0_7, %c0_8] : memref<1x16x128xbf16, #tpu.memory_space<vmem>>, vector<1x16x128xbf16>
    %5 = vector.shape_cast %4 : vector<1x16x128xbf16> to vector<16x128xbf16>
    %6 = arith.extf %5 : vector<16x128xbf16> to vector<16x128xf32>
    %cst = arith.constant 1.500000e+00 : f32
    %7 = vector.broadcast %cst : f32 to vector<16x128xf32>
    %8 = arith.cmpf olt, %6, %7 : vector<16x128xf32>
    %9 = arith.extui %8 : vector<16x128xi1> to vector<16x128xi32>
    %10 = arith.sitofp %9 : vector<16x128xi32> to vector<16x128xf32>
    %11 = arith.mulf %6, %10 : vector<16x128xf32>
    %cst_9 = arith.constant 2.000000e+00 : f32
    %12 = vector.broadcast %cst_9 : f32 to vector<16x128xf32>
    %13 = arith.mulf %12, %11 : vector<16x128xf32>
    %cst_10 = arith.constant 1.000000e+00 : f32
    %14 = vector.broadcast %cst_10 : f32 to vector<16x128xf32>
    %15 = arith.subf %14, %13 : vector<16x128xf32>
    %16 = arith.subf %3, %1 : vector<16x128xf32>
    %17 = arith.mulf %15, %16 : vector<16x128xf32>
    %cst_11 = arith.constant 0.000000e+00 : f32
    %18 = vector.broadcast %cst_11 : f32 to vector<16x128xf32>
    %19 = arith.maximumf %17, %18 : vector<16x128xf32>
    %20 = math.absf %17 : vector<16x128xf32>
    %cst_12 = arith.constant 0.000000e+00 : f32
    %21 = vector.broadcast %cst_12 : f32 to vector<16x128xf32>
    %22 = arith.subf %21, %20 : vector<16x128xf32>
    %23 = math.exp %22 : vector<16x128xf32>
    %24 = math.log1p %23 : vector<16x128xf32>
    %25 = arith.addf %19, %24 : vector<16x128xf32>
    %26 = arith.mulf %25, %10 : vector<16x128xf32>
    %cst_13 = arith.constant dense<0.000000e+00> : vector<128xf32>
    %27 = vector.multi_reduction <add>, %26, %cst_13 [0] : vector<16x128xf32> to vector<128xf32>
    %28 = vector.shape_cast %27 : vector<128xf32> to vector<1x128xf32>
    %29 = arith.mulf %26, %11 : vector<16x128xf32>
    %cst_14 = arith.constant dense<0.000000e+00> : vector<128xf32>
    %30 = vector.multi_reduction <add>, %29, %cst_14 [0] : vector<16x128xf32> to vector<128xf32>
    %31 = vector.shape_cast %30 : vector<128xf32> to vector<1x128xf32>
    %cst_15 = arith.constant dense<0.000000e+00> : vector<128xf32>
    %32 = vector.multi_reduction <add>, %11, %cst_15 [0] : vector<16x128xf32> to vector<128xf32>
    %33 = vector.shape_cast %32 : vector<128xf32> to vector<1x128xf32>
    %34 = tpu.iota {dimensions = array<i32: 0>} : vector<8x128xi32>
    %c0_i32 = arith.constant 0 : i32
    %35 = vector.broadcast %c0_i32 : i32 to vector<8x128xi32>
    %36 = arith.cmpi eq, %34, %35 : vector<8x128xi32>
    %c1_i32 = arith.constant 1 : i32
    %37 = vector.broadcast %c1_i32 : i32 to vector<8x128xi32>
    %38 = arith.cmpi eq, %34, %37 : vector<8x128xi32>
    %c2_i32 = arith.constant 2 : i32
    %39 = vector.broadcast %c2_i32 : i32 to vector<8x128xi32>
    %40 = arith.cmpi eq, %34, %39 : vector<8x128xi32>
    %cst_16 = arith.constant 0.000000e+00 : f32
    %41 = vector.shape_cast %33 : vector<1x128xf32> to vector<1x128xf32>
    %42 = vector.broadcast %41 : vector<1x128xf32> to vector<8x128xf32>
    %43 = vector.broadcast %cst_16 : f32 to vector<8x128xf32>
    %44 = arith.select %40, %42, %43 : vector<8x128xi1>, vector<8x128xf32>
    %45 = vector.shape_cast %31 : vector<1x128xf32> to vector<1x128xf32>
    %46 = vector.broadcast %45 : vector<1x128xf32> to vector<8x128xf32>
    %47 = arith.select %38, %46, %44 : vector<8x128xi1>, vector<8x128xf32>
    %48 = vector.shape_cast %28 : vector<1x128xf32> to vector<1x128xf32>
    %49 = vector.broadcast %48 : vector<1x128xf32> to vector<8x128xf32>
    %50 = arith.select %36, %49, %47 : vector<8x128xi1>, vector<8x128xf32>
    %c0_17 = arith.constant 0 : index
    %c0_18 = arith.constant 0 : index
    %c0_19 = arith.constant 0 : index
    %c0_20 = arith.constant 0 : index
    %51 = vector.load %arg4[%c0_17, %c0_18, %c0_19, %c0_20] : memref<1x1x8x128xf32, #tpu.memory_space<vmem>>, vector<1x1x8x128xf32>
    %52 = vector.shape_cast %51 : vector<1x1x8x128xf32> to vector<8x128xf32>
    %53 = vector.shape_cast %50 : vector<8x128xf32> to vector<1x1x8x128xf32>
    tpu.vector_store %arg4[%c0_17, %c0_18, %c0_19, %c0_20], %53 {strides = array<i32>} : memref<1x1x8x128xf32, #tpu.memory_space<vmem>>, vector<1x1x8x128xf32>,
    return
  }
  func.func @transform_0(%arg0: i32, %arg1: i32) -> (i32, i32, i32, i32) {
    %c0_i32 = arith.constant 0 : i32
    %c0_i32_0 = arith.constant 0 : i32
    %c0_i32_1 = arith.constant 0 : i32
    return %arg0, %c0_i32, %arg1, %c0_i32_0 : i32, i32, i32, i32
  }
  func.func @transform_1(%arg0: i32, %arg1: i32) -> (i32, i32, i32) {
    %c0_i32 = arith.constant 0 : i32
    %c0_i32_0 = arith.constant 0 : i32
    return %arg0, %arg1, %c0_i32 : i32, i32, i32
  }
  func.func @transform_2(%arg0: i32, %arg1: i32) -> (i32, i32, i32, i32) {
    %c0_i32 = arith.constant 0 : i32
    %c0_i32_0 = arith.constant 0 : i32
    %c0_i32_1 = arith.constant 0 : i32
    return %arg0, %arg1, %c0_i32, %c0_i32_0 : i32, i32, i32, i32
  }
}

</mosaic_0001>

<llo_original>
// kernel: tpu_custom_call.1
$region0: #{tpu_custom_call.1}
  #allocation0 [shape = 'u32[]', space=smem, size = 0x4, offset = 0x4, fixed_abs, tag = 'smem constant byte address 0x4 - core index']
  #allocation1 [shape = 'u32[144,128]{1,0:T(1,128)}', space=vmem, size = 0x12000, scoped, tag = 'internal scratch']
  %s0 = inlined_call_operand.hbm [shape: f32[2,2,16,128], index: 0, kind: input, shape index: {}]
  %s1 = inlined_call_operand.hbm [shape: bf16[2,16,128], index: 1, kind: input, shape index: {}]
  %s2 = inlined_call_operand.hbm [shape: f32[2,1,8,128], index: 2, kind: output, shape index: {}]
  %s3 = sld [smem:[#allocation0]]
  $region49: #{tpu_custom_call.1} parent=0
    _
  %s5 = ssub.s32 1, %s3
  %s6 = scalar_select 0, %s5, %s3
  $region1: #{tpu_custom_call.1} parent=0
    #allocation2 [shape = 'u8[32768]{0}', space=vmem, size = 0x8000, scoped, tag = 'input window, operand 0']
    #allocation3 [shape = 's32[2]{0}', space=sflag, size = 0x8, scoped, tag = 'scoped memory for tpu_custom_call.1']
    #allocation4 [shape = 's32[2]{0}', space=sflag, size = 0x8, scoped, tag = 'scoped memory for tpu_custom_call.1']
    #allocation5 [shape = 'u8[8192]{0}', space=vmem, size = 0x2000, scoped, tag = 'input window, operand 1']
    #allocation6 [shape = 's32[2]{0}', space=sflag, size = 0x8, scoped, tag = 'scoped memory for tpu_custom_call.1']
    #allocation7 [shape = 'u8[8192]{0}', space=vmem, size = 0x2000, scoped, tag = 'output window, operand 0']
    %7 = vsyncpa [#allocation3], 0
    %s8 = scalar_lea.sflag [#allocation3], 1
    %9 = vsyncpa %s8, 0
    %10 = vsyncpa [#allocation6], 0
    %s11 = scalar_lea.sflag [#allocation6], 1
    %12 = vsyncpa %s11, 0
    %13 = vsyncpa [#allocation4], 0
    %s14 = scalar_lea.sflag [#allocation4], 1
    %15 = vsyncpa %s14, 0
    loop: start=0, step=1, limit=4
    $region2: #{tpu_custom_call.1} parent=1 // loop_pre_header
      _
    $region3: #{tpu_custom_call.1} parent=1 // loop_header
      %s17 = sphi 0, %s21
      %p18 = scmp.ge.s32.totalorder %s17, 4
      %s24 = sphi 0, %s36
      %s25 = sphi 0, %s32
      %s26 = sphi 0, %s24
      %s27 = sphi 0, %s25
      %s28 = sphi 0, %s26
      %s29 = sphi 0, %s27
      %s41 = sphi 0, %s43
      %s44 = sphi 0, %s41
      %s45 = sphi 0, %s44
      %s61 = sphi 0, %s45
      %s69 = sphi 0, %s71
      %s72 = sphi 0, %s69
      %s73 = sphi 0, %s72
      %s89 = sphi 0, %s73
      %s97 = sphi 0, %s99
      %s100 = sphi 0, %s97
      %s101 = sphi 0, %s100
      %s117 = sphi 0, %s101
    $region4: #{tpu_custom_call.1} parent=1 // loop_header_branch
      %20 = sbr.rel (%p18) target = $region8
    $region5: #{tpu_custom_call.1} parent=1 // loop_body
      %s22 = ssub.s32 %s17, 1
      %s23 = ssub.s32 %s17, 2
      %s30 = sadd.s32 1, %s25
      %p31 = scmp.ge.s32.totalorder %s30, 1
      %s32 = scalar_select %p31, 0, %s30
      %s33 = sadd.s32 1, %s24
      %s34 = scalar_select %p31, %s33, %s24
      %p35 = scmp.ge.s32.totalorder %s34, 2
      %s36 = scalar_select %p35, 0, %s34
      %s37 = ssub.s32 %s24, %s36
      %s38 = ssub.s32 %s25, %s32
      %s39 = sor.u32 %s37, %s38
      %p40 = scmp.eq.s32.totalorder %s39, 0
      %s42 = sadd.s32 %s41, 1
      %s43 = scalar_select %p40, %s41, %s42
      %p46 = pneg %p40
      %p47 = scmp.eq.s32.totalorder %s17, 1
      %p48 = por %p46, %p47
      %p49 = scmp.ne.s32.totalorder %s41, %s44
      %p50 = scmp.eq.s32.totalorder %s17, 0
      %p51 = por %p49, %p50
      %p52 = scmp.ne.s32.totalorder %s41, %s44
      %p53 = scmp.eq.s32.totalorder %s22, 1
      %p54 = por %p52, %p53
      %p55 = scmp.ne.s32.totalorder %s44, %s45
      %p56 = scmp.eq.s32.totalorder %s22, 0
      %p57 = por %p55, %p56
      %p58 = scmp.ne.s32.totalorder %s44, %s45
      %p59 = scmp.eq.s32.totalorder %s23, 1
      %p60 = por %p58, %p59
      %p62 = scmp.ne.s32.totalorder %s45, %s61
      %p63 = scmp.eq.s32.totalorder %s23, 0
      %p64 = por %p62, %p63
      %s65 = ssub.s32 %s24, %s36
      %s66 = ssub.s32 %s25, %s32
      %s67 = sor.u32 %s65, %s66
      %p68 = scmp.eq.s32.totalorder %s67, 0
      %s70 = sadd.s32 %s69, 1
      %s71 = scalar_select %p68, %s69, %s70
      %p74 = pneg %p68
      %p75 = scmp.eq.s32.totalorder %s17, 1
      %p76 = por %p74, %p75
      %p77 = scmp.ne.s32.totalorder %s69, %s72
      %p78 = scmp.eq.s32.totalorder %s17, 0
      %p79 = por %p77, %p78
      %p80 = scmp.ne.s32.totalorder %s69, %s72
      %p81 = scmp.eq.s32.totalorder %s22, 1
      %p82 = por %p80, %p81
      %p83 = scmp.ne.s32.totalorder %s72, %s73
      %p84 = scmp.eq.s32.totalorder %s22, 0
      %p85 = por %p83, %p84
      %p86 = scmp.ne.s32.totalorder %s72, %s73
      %p87 = scmp.eq.s32.totalorder %s23, 1
      %p88 = por %p86, %p87
      %p90 = scmp.ne.s32.totalorder %s73, %s89
      %p91 = scmp.eq.s32.totalorder %s23, 0
      %p92 = por %p90, %p91
      %s93 = ssub.s32 %s24, %s36
      %s94 = ssub.s32 %s25, %s32
      %s95 = sor.u32 %s93, %s94
      %p96 = scmp.eq.s32.totalorder %s95, 0
      %s98 = sadd.s32 %s97, 1
      %s99 = scalar_select %p96, %s97, %s98
      %p102 = pneg %p96
      %p103 = scmp.eq.s32.totalorder %s17, 1
      %p104 = por %p102, %p103
      %p105 = scmp.ne.s32.totalorder %s97, %s100
      %p106 = scmp.eq.s32.totalorder %s17, 0
      %p107 = por %p105, %p106
      %p108 = scmp.ne.s32.totalorder %s97, %s100
      %p109 = scmp.eq.s32.totalorder %s22, 1
      %p110 = por %p108, %p109
      %p111 = scmp.ne.s32.totalorder %s100, %s101
      %p112 = scmp.eq.s32.totalorder %s22, 0
      %p113 = por %p111, %p112
      %p114 = scmp.ne.s32.totalorder %s100, %s101
      %p115 = scmp.eq.s32.totalorder %s23, 1
      %p116 = por %p114, %p115
      %p118 = scmp.ne.s32.totalorder %s101, %s117
      %p119 = scmp.eq.s32.totalorder %s23, 0
      %p120 = por %p118, %p119
      %p121 = scmp.le.s32.totalorder 1, %s17
      %p122 = scmp.lt.s32.totalorder %s17, 3
      %p123 = pnand %p121, %p122
      %p124 = pneg %p123
      // Predicated region
      $region9: #{tpu_custom_call.1} parent=5 // pred_check
        _
      $region10: #{tpu_custom_call.1} parent=5 // pred_check_branch
        %126 = sbr.rel (%p123) target = $region12
      $region11: #{tpu_custom_call.1} parent=5 // pred_region
        %s127 = ssub.s32 %s17, 1
      $region12: #{tpu_custom_call.1} parent=5 // pred_fallthru
        _
      %p128 = scmp.lt.s32.totalorder %s17, 2
      // Predicated region
      $region13: #{tpu_custom_call.1} parent=5 // pred_check
        %p129 = pneg %p128
      $region14: #{tpu_custom_call.1} parent=5 // pred_check_branch
        %131 = sbr.rel (%p129) target = $region16
      $region15: #{tpu_custom_call.1} parent=5 // pred_region
        // Predicated region
        $region17: #{tpu_custom_call.1} parent=15 // pred_check
          %p132 = pneg %p51
        $region18: #{tpu_custom_call.1} parent=15 // pred_check_branch
          %134 = sbr.rel (%p132) target = $region20
        $region19: #{tpu_custom_call.1} parent=15 // pred_region
          %s135 = sand.u32 %s41, 1
          %s136 = scalar_lea.sflag [#allocation3], %s135
          %s137 = sand.u32 %s41, 1
          %s138 = smul.addr %s137, 32
          %s139 = scalar_lea.vmem [#allocation2], %s138
          %s140 = smul.u32 2, %s25
          %s142 = ssub.s32 512, 512
          %143 = vsyncadd %s136, %s142
          %s144 = smul.addr %s24, 4
          %s145 = sadd.s32 %s140, %s144
          %s146 = smul.addr %s145, 128
          %s147 = scalar_lea.hbm %s0, %s146
          %s148 = sshll.u32 %s139, 4
          %s149 = int_to_ptr.vmem [resolvable:$true] %s148
          %154 = dma.hbm_to_vmem [thread:$0]  %s147, 512, %s149, %s136, 128, 128, 8
        $region20: #{tpu_custom_call.1} parent=15 // pred_fallthru
          _
        // Predicated region
        $region21: #{tpu_custom_call.1} parent=15 // pred_check
          %p155 = pneg %p79
        $region22: #{tpu_custom_call.1} parent=15 // pred_check_branch
          %157 = sbr.rel (%p155) target = $region24
        $region23: #{tpu_custom_call.1} parent=15 // pred_region
          %s158 = sand.u32 %s69, 1
          %s159 = scalar_lea.sflag [#allocation6], %s158
          %s160 = sand.u32 %s69, 1
          %s161 = smul.addr %s160, 8
          %s162 = scalar_lea.vmem [#allocation5], %s161
          %s163 = smul.u32 2, %s25
          %s165 = ssub.s32 128, 128
          %166 = vsyncadd %s159, %s165
          %s167 = smul.addr %s24, 2
          %s168 = sadd.s32 %s163, %s167
          %s169 = smul.addr %s168, 64
          %s170 = scalar_lea.hbm %s1, %s169
          %s171 = sshll.u32 %s162, 4
          %s172 = int_to_ptr.vmem [resolvable:$true] %s171
          %177 = dma.hbm_to_vmem [thread:$0]  %s170, 128, %s172, %s159, 64, 64, 4
        $region24: #{tpu_custom_call.1} parent=15 // pred_fallthru
          _
      $region16: #{tpu_custom_call.1} parent=5 // pred_fallthru
        _
      %p178 = scmp.le.s32.totalorder 1, %s17
      %p179 = scmp.lt.s32.totalorder %s17, 3
      %p180 = pnand %p178, %p179
      %p181 = pneg %p180
      // Predicated region
      $region25: #{tpu_custom_call.1} parent=5 // pred_check
        _
      $region26: #{tpu_custom_call.1} parent=5 // pred_check_branch
        %183 = sbr.rel (%p180) target = $region28
      $region27: #{tpu_custom_call.1} parent=5 // pred_region
        %s184 = ssub.s32 %s17, 1
        %s185 = sand.u32 %s44, 1
        %s186 = scalar_lea.sflag [#allocation3], %s185
        %s187 = sand.u32 %s44, 1
        %s188 = smul.addr %s187, 32
        %s189 = scalar_lea.vmem [#allocation2], %s188
        // Predicated region
        $region29: #{tpu_custom_call.1} parent=27 // pred_check
          %p190 = pneg %p57
        $region30: #{tpu_custom_call.1} parent=27 // pred_check_branch
          %192 = sbr.rel (%p190) target = $region32
        $region31: #{tpu_custom_call.1} parent=27 // pred_region
          %193 = dma.done %s186, 512
        $region32: #{tpu_custom_call.1} parent=27 // pred_fallthru
          _
        %s194 = sand.u32 %s72, 1
        %s195 = scalar_lea.sflag [#allocation6], %s194
        %s196 = sand.u32 %s72, 1
        %s197 = smul.addr %s196, 8
        %s198 = scalar_lea.vmem [#allocation5], %s197
        // Predicated region
        $region33: #{tpu_custom_call.1} parent=27 // pred_check
          %p199 = pneg %p85
        $region34: #{tpu_custom_call.1} parent=27 // pred_check_branch
          %201 = sbr.rel (%p199) target = $region36
        $region35: #{tpu_custom_call.1} parent=27 // pred_region
          %202 = dma.done %s195, 128
        $region36: #{tpu_custom_call.1} parent=27 // pred_fallthru
          _
        %s203 = sand.u32 %s44, 1
        %s204 = scalar_lea.sflag [#allocation3], %s203
        %s205 = sand.u32 %s44, 1
        %s206 = smul.addr %s205, 32
        %s207 = scalar_lea.vmem [#allocation2], %s206
        %p208 = pneg %p57
        %p209 = pneg %p54
        %s210 = sand.u32 %s72, 1
        %s211 = scalar_lea.sflag [#allocation6], %s210
        %s212 = sand.u32 %s72, 1
        %s213 = smul.addr %s212, 8
        %s214 = scalar_lea.vmem [#allocation5], %s213
        %p215 = pneg %p85
        %p216 = pneg %p82
        %p217 = pneg %p113
        %p218 = pneg %p110
        %s219 = sand.u32 %s100, 1
        %s220 = scalar_lea.sflag [#allocation4], %s219
        %s221 = sand.u32 %s100, 1
        %s222 = smul.addr %s221, 8
        %s223 = scalar_lea.vmem [#allocation7], %s222
        %s224 = smul.u32 2, %s27
        %s225 = smul.u32 2, %s27
        %v226 = vld [vmem:[%s189] sm:$0xff]
        %v227 = vld [vmem:[%s189 + $0x8] sm:$0xff]
        %s228 = scalar_lea.vmem %s189, 16 [#allocation2]
        %v229 = vld [vmem:[%s228] sm:$0xff]
        %v230 = vld [vmem:[%s228 + $0x8] sm:$0xff]
        %v231 = vld [vmem:[%s198] sm:$0xf]
        %v232 = vld [vmem:[%s198 + $0x4] sm:$0xf]
        %v233 = vunpack.c.l.bf16 %v231
        %v234 = vunpack.c.l.bf16 %v232
        %vm235 = vcmp.lt.f32.partialorder %v233, 1.5
        %vm236 = vcmp.lt.f32.partialorder %v234, 1.5
        %v237 = vsel %vm235, 1, 0
        %v238 = vsel %vm236, 1, 0
        %v239 = vcvt.s32.f32 %v237
        %v240 = vcvt.s32.f32 %v238
        %v241 = vmul.f32 %v233, %v239
        %v242 = vmul.f32 %v234, %v240
        %v243 = vmul.f32 %v241, 2.0
        %v244 = vmul.f32 %v242, 2.0
        %v245 = vsub.f32 1.0, %v243
        %v246 = vsub.f32 1.0, %v244
        %v247 = vsub.f32 %v229, %v226
        %v248 = vsub.f32 %v230, %v227
        %v249 = vmul.f32 %v245, %v247
        %v250 = vmul.f32 %v246, %v248
        %v251 = vmax.f32 %v249, 0.0
        %v252 = vmax.f32 %v250, 0.0
        %v253 = vand.u32 2147483647, %v249
        %v254 = vand.u32 2147483647, %v250
        %v255 = vsub.f32 0.0, %v253
        %v256 = vsub.f32 0.0, %v254
        %v257 = vmul.f32 %v255, 1.442695
        %v258 = vpow.pop %v257
        %v259 = vmul.f32 %v256, 1.442695
        %v260 = vpow.pop %v259
        %v261 = vadd.f32 %v258, 1.0
        %v262 = vlog2.pop %v261
        %v263 = vmul.f32 %v262, 0.6931472
        %v264 = vmul.f32 -0.5, %v258
        %v265 = vadd.f32 %v264, 1.0
        %v266 = vmul.f32 %v265, %v258
        %v267 = vand.u32 2147483647, %v258
        %vm268 = vcmp.lt.f32.partialorder %v267, 0.0004427343
        %v269 = vsel %vm268, %v266, %v263
        %v270 = vadd.f32 %v260, 1.0
        %v271 = vlog2.pop %v270
        %v272 = vmul.f32 %v271, 0.6931472
        %v273 = vmul.f32 -0.5, %v260
        %v274 = vadd.f32 %v273, 1.0
        %v275 = vmul.f32 %v274, %v260
        %v276 = vand.u32 2147483647, %v260
        %vm277 = vcmp.lt.f32.partialorder %v276, 0.0004427343
        %v278 = vsel %vm277, %v275, %v272
        %v279 = vadd.f32 %v251, %v269
        %v280 = vadd.f32 %v252, %v278
        %v281 = vmul.f32 %v279, %v239
        %v282 = vmul.f32 %v280, %v240
        %v283 = vadd.f32 %v281, %v282
        %v284 = vrot.slane %v283, 4
        %v285 = vadd.f32 %v283, %v284
        %v286 = vrot.slane %v285, 2
        %v287 = vadd.f32 %v285, %v286
        %v288 = vrot.slane %v287, 1
        %v289 = vadd.f32 %v287, %v288
        %v290 = vmul.f32 %v281, %v241
        %v291 = vmul.f32 %v282, %v242
        %v292 = vadd.f32 %v290, %v291
        %v293 = vrot.slane %v292, 4
        %v294 = vadd.f32 %v292, %v293
        %v295 = vrot.slane %v294, 2
        %v296 = vadd.f32 %v294, %v295
        %v297 = vrot.slane %v296, 1
        %v298 = vadd.f32 %v296, %v297
        %v299 = vadd.f32 %v241, %v242
        %v300 = vrot.slane %v299, 4
        %v301 = vadd.f32 %v299, %v300
        %v302 = vrot.slane %v301, 2
        %v303 = vadd.f32 %v301, %v302
        %v304 = vrot.slane %v303, 1
        %v305 = vadd.f32 %v303, %v304
        %v306 = vlaneseq
        %v307 = vshrl.u32 %v306, 7
        %vm308 = vcmp.eq.s32.totalorder %v307, 0
        %vm309 = vcmp.eq.s32.totalorder %v307, 1
        %vm310 = vcmp.eq.s32.totalorder %v307, 2
        %v311 = vsel %vm310, %v305, 0.0
        %v312 = vsel %vm309, %v298, %v311
        %v313 = vsel %vm308, %v289, %v312
        %314 = vst [vmem:[%s223] sm:$0xff] %v313
        %s315 = sand.u32 %s100, 1
        %s316 = scalar_lea.sflag [#allocation4], %s315
        %s317 = sand.u32 %s100, 1
        %s318 = smul.addr %s317, 8
        %s319 = scalar_lea.vmem [#allocation7], %s318
        // Predicated region
        $region37: #{tpu_custom_call.1} parent=27 // pred_check
          %p320 = pneg %p110
        $region38: #{tpu_custom_call.1} parent=27 // pred_check_branch
          %322 = sbr.rel (%p320) target = $region40
        $region39: #{tpu_custom_call.1} parent=27 // pred_region
          %s324 = ssub.s32 128, 128
          %325 = vsyncadd %s316, %s324
          %s326 = sadd.s32 %s27, %s26
          %s327 = smul.addr %s326, 128
          %s328 = scalar_lea.hbm %s2, %s327
          %s330 = sshll.u32 %s319, 4
          %s331 = int_to_ptr.vmem [resolvable:$true] %s330
          %333 = dma.vmem_to_hbm [thread:$0]  %s331, 128, %s328, %s316
        $region40: #{tpu_custom_call.1} parent=27 // pred_fallthru
          _
      $region28: #{tpu_custom_call.1} parent=5 // pred_fallthru
        _
      %p334 = scmp.le.s32.totalorder 2, %s17
      // Predicated region
      $region41: #{tpu_custom_call.1} parent=5 // pred_check
        %p335 = pneg %p334
      $region42: #{tpu_custom_call.1} parent=5 // pred_check_branch
        %337 = sbr.rel (%p335) target = $region44
      $region43: #{tpu_custom_call.1} parent=5 // pred_region
        %s338 = ssub.s32 %s17, 2
        // Predicated region
        $region45: #{tpu_custom_call.1} parent=43 // pred_check
          %p339 = pneg %p116
        $region46: #{tpu_custom_call.1} parent=43 // pred_check_branch
          %341 = sbr.rel (%p339) target = $region48
        $region47: #{tpu_custom_call.1} parent=43 // pred_region
          %s342 = sand.u32 %s101, 1
          %s343 = scalar_lea.sflag [#allocation4], %s342
          %s344 = sand.u32 %s101, 1
          %s345 = smul.addr %s344, 8
          %s346 = scalar_lea.vmem [#allocation7], %s345
          %347 = dma.done %s343, 128
        $region48: #{tpu_custom_call.1} parent=43 // pred_fallthru
          _
      $region44: #{tpu_custom_call.1} parent=5 // pred_fallthru
        _
    $region6: #{tpu_custom_call.1} parent=1 // loop_footer
      %s21 = sadd.s32 1, %s17
    $region7: #{tpu_custom_call.1} parent=1 // loop_footer_branch
      %16 = sbr.rel target = $region3
    $region8: #{tpu_custom_call.1} parent=1 // loop_exit
      _
    %348 = vsyncpa [#allocation3], 1
    %s349 = scalar_lea.sflag [#allocation3], 1
    %350 = vsyncpa %s349, 1
    %351 = vsyncpa [#allocation6], 1
    %s352 = scalar_lea.sflag [#allocation6], 1
    %353 = vsyncpa %s352, 1
    %354 = vsyncpa [#allocation4], 1
    %s355 = scalar_lea.sflag [#allocation4], 1
    %356 = vsyncpa %s355, 1

</llo_original>
